<compile_context>
chip_gen: v5e
topology: v5e:2x2
jax: 0.10.0
libtpu: 0.0.40
codegen_flags: <defaults>
</compile_context>

<pallas_src>
import jax
import jax.numpy as jnp
from jax.experimental import pallas as pl
from jax.experimental.pallas import tpu as pltpu

# ---------------- problem sizes ----------------
B = 2          # batch
T = 8          # sequence length
H = 32         # hidden dim (HIDDEN)
F = 8          # output dim (FEATURE)
IN = 1         # LSTM input dim (module hard-codes input_dim = 1)
G = 4 * H      # gate width


# ---------------- Pallas kernel ----------------
def attn_lstm_kernel(
    x_ref,      # (BT, T)            batch-tiled input, time on lanes
    wihb_ref,   # (2, 4H)            row 0: W_ih^T, row 1: b_ih + b_hh
    wrec_ref,   # (H, 4H + H+1 + F)  [W_hh^T | W_ha^T | W_ha^T@W_att^T | W_fc^T]
    bias_ref,   # (1, H + F)         [b_ha | b_fc]
    out_ref,    # (BT, F)
):
    bt = out_ref.shape[0]

    # Static ref slices of the packed inputs (zero-cost views).
    w_ih = wihb_ref[0:1, :]                       # (1, 4H)
    b_g = wihb_ref[1:2, :]                        # (1, 4H)
    w_hh = wrec_ref[:, 0:G]                       # (H, 4H)
    w_ha_cat = wrec_ref[:, G:G + H + 1]           # (H, H+1)
    w_fc = wrec_ref[:, G + H + 1:]                # (H, F)
    b_ha = bias_ref[:, 0:H]                       # (1, H)
    b_fc = bias_ref[:, H:H + F]                   # (1, F)

    x = x_ref[...]                                # (BT, T)

    # Lane mask selecting the 'g' gate (PyTorch gate order i, f, g, o ->
    # lanes [2H, 3H)) which takes tanh; all other lanes take sigmoid.
    lane = jax.lax.broadcasted_iota(jnp.int32, (bt, G), 1)
    g_mask = (lane >= 2 * H) & (lane < 3 * H)

    h = jnp.zeros((bt, H), jnp.float32)           # init_hidden(): zeros
    c = jnp.zeros((bt, H), jnp.float32)

    a_ts = []          # a_t = h_t @ W_ha^T + b_ha          (BT, H)
    logit_cols = []    # attention logit (constant shift dropped)  (BT, 1)

    # ---- fully unrolled LSTM recurrence with fused attention projection ----
    for t in range(T):
        # Input projection: off the h-dependency chain (free filler).
        xp = x[:, t:t + 1] * w_ih + b_g                                    # (BT, 4H)
        gates = xp + jnp.dot(h, w_hh, preferred_element_type=jnp.float32)  # (BT, 4H)
        act = jnp.where(g_mask, jnp.tanh(gates), jax.nn.sigmoid(gates))
        i_g = act[:, 0 * H:1 * H]
        f_g = act[:, 1 * H:2 * H]
        g_g = act[:, 2 * H:3 * H]
        o_g = act[:, 3 * H:4 * H]
        c = f_g * c + i_g * g_g
        h = o_g * jnp.tanh(c)
        # One dot yields [a_t (without bias) | logit_t] -- W_att folded in.
        acol = jnp.dot(h, w_ha_cat, preferred_element_type=jnp.float32)   # (BT, H+1)
        a_ts.append(acol[:, 0:H] + b_ha)
        logit_cols.append(acol[:, H:H + 1])

    # ---- batched attention epilogue (softmax over the time axis) ----
    logits = jnp.concatenate(logit_cols, axis=1)               # (BT, T)
    m = jnp.max(logits, axis=1, keepdims=True)
    e = jnp.exp(logits - m)
    inv = pl.reciprocal(jnp.sum(e, axis=1, keepdims=True), approx=True)
    alpha = e * inv                                            # (BT, T)

    # Weighted sum, tree-reduced (depth ~log2(T) instead of T-1 dependent adds).
    terms = [alpha[:, t:t + 1] * a_ts[t] for t in range(T)]
    while len(terms) > 1:
        nxt = [terms[i] + terms[i + 1] for i in range(0, len(terms) - 1, 2)]
        if len(terms) % 2:
            nxt.append(terms[-1])
        terms = nxt
    ws = terms[0]                                              # (BT, H)

    out_ref[...] = jnp.dot(ws, w_fc, preferred_element_type=jnp.float32) + b_fc


# ---------------- wrapper ----------------
def attn_lstm_forward(x, params):
    """x: (B, T) or (B, T, 1) float32.  Returns (B, F)."""
    if x.ndim == 3:
        x = x[..., 0]
    Bn, Tn = x.shape
    assert Tn == T
    x = x.astype(jnp.float32)

    # ---- pack parameters into 3 arrays (fewer grid-start DMAs) ----
    wihb = jnp.concatenate(
        [params["W_ih"].T.astype(jnp.float32),                         # (1, 4H)
         (params["b_ih"] + params["b_hh"]).astype(jnp.float32)[None, :]],
        axis=0)                                                        # (2, 4H)

    w_hh_t = params["W_hh"].T.astype(jnp.float32)                      # (H, 4H)
    w_ha_t = params["W_ha"].T.astype(jnp.float32)                      # (H, H)
    w_att_t = params["W_att"].T.astype(jnp.float32)                    # (H, 1)
    w_ha_att = w_ha_t @ w_att_t                                        # (H, 1)  fold W_att
    w_fc_t = params["W_fc"].T.astype(jnp.float32)                      # (H, F)
    wrec = jnp.concatenate([w_hh_t, w_ha_t, w_ha_att, w_fc_t], axis=1)  # (H, 4H+H+1+F)

    bias_pack = jnp.concatenate(
        [params["b_ha"].astype(jnp.float32),
         params["b_fc"].astype(jnp.float32)])[None, :]                 # (1, H+F)

    # ---- batch tiling: full sublane occupancy, parallel grid over tiles ----
    if Bn <= 8:
        BT = Bn
    else:
        # TODO(synk): pad / remainder tile for batches not a multiple of 8.
        assert Bn % 8 == 0, "batch >= 8 must be a multiple of 8"
        BT = 8
        for cand in (64, 32, 16):          # cap at 64 so a_ts stay in vregs
            if Bn % cand == 0:
                BT = cand
                break
    nb = Bn // BT

    def rep(shape):        # weights/biases: same full-array block every grid step
        return pl.BlockSpec(shape, lambda i: (0, 0))

    in_specs = [
        pl.BlockSpec((BT, T), lambda i: (i, 0)),   # x (batch-tiled)
        rep((2, G)),                               # [W_ih^T ; b]
        rep((H, G + H + 1 + F)),                   # packed recurrent/attn/fc weights
        rep((1, H + F)),                           # [b_ha | b_fc]
    ]
    out_spec = pl.BlockSpec((BT, F), lambda i: (i, 0))

    return pl.pallas_call(
        attn_lstm_kernel,
        out_shape=jax.ShapeDtypeStruct((Bn, F), jnp.float32),
        grid=(nb,),
        in_specs=in_specs,
        out_specs=out_spec,
        compiler_params=pltpu.CompilerParams(
            dimension_semantics=("parallel",)),
    )(x, wihb, wrec, bias_pack)


# ---------------- pure-JAX reference (for verification) ----------------
def ref_forward(x, p):
    if x.ndim == 2:
        x = x[:, :, None]
    Bn, Tn, _ = x.shape
    h0 = jnp.zeros((Bn, H), jnp.float32)
    c0 = jnp.zeros((Bn, H), jnp.float32)

    def step(carry, xt):
        h, c = carry
        gates = xt @ p["W_ih"].T + h @ p["W_hh"].T + p["b_ih"] + p["b_hh"]
        i, f, g, o = jnp.split(gates, 4, axis=1)
        i, f, g, o = jax.nn.sigmoid(i), jax.nn.sigmoid(f), jnp.tanh(g), jax.nn.sigmoid(o)
        c = f * c + i * g
        h = o * jnp.tanh(c)
        return (h, c), h

    (_, _), hs = jax.lax.scan(step, (h0, c0), jnp.transpose(x, (1, 0, 2)))
    lstm_out = jnp.transpose(hs, (1, 0, 2))                       # (B, T, H)
    a = lstm_out @ p["W_ha"].T + p["b_ha"]                        # (B, T, H)
    logits = a @ p["W_att"].T                                     # (B, T, 1)
    alpha = jax.nn.softmax(logits, axis=1)                        # (B, T, 1)
    ws = jnp.sum(alpha * a, axis=1)                               # (B, H)
    return ws @ p["W_fc"].T + p["b_fc"]                           # (B, F)


def init_params(key):
    scale = 1.0 / jnp.sqrt(H)
    ks = jax.random.split(key, 9)
    u = lambda k, shape: jax.random.uniform(k, shape, jnp.float32, -scale, scale)
    return {
        "W_ih": u(ks[0], (4 * H, IN)),
        "W_hh": u(ks[1], (4 * H, H)),
        "b_ih": u(ks[2], (4 * H,)),
        "b_hh": u(ks[3], (4 * H,)),
        "W_ha": u(ks[4], (H, H)),
        "b_ha": u(ks[5], (H,)),
        "W_att": u(ks[6], (1, H)),
        "W_fc": u(ks[7], (F, H)),
        "b_fc": u(ks[8], (F,)),
    }


if __name__ == "__main__":
    key = jax.random.PRNGKey(0)
    pkey, xkey = jax.random.split(key)
    params = init_params(pkey)
    x = jax.random.normal(xkey, (B, T), jnp.float32)   # forward() unsqueezes to (B, T, 1)

    out = attn_lstm_forward(x, params)
    out = jax.block_until_ready(out)

    ref = jax.block_until_ready(ref_forward(x, params))
    assert out.shape == (B, F)
    assert jnp.allclose(out, ref, rtol=1e-3, atol=1e-3), (out, ref)
    print("KERNEL_OK")
</pallas_src>

<mosaic_0001>
module attributes {stable_mosaic.version = 11 : i64} {
  func.func @attn_lstm_kernel(%arg0: i32, %arg1: memref<2x8xf32, #tpu.memory_space<vmem>>, %arg2: memref<2x128xf32, #tpu.memory_space<vmem>>, %arg3: memref<32x169xf32, #tpu.memory_space<vmem>>, %arg4: memref<1x40xf32, #tpu.memory_space<vmem>>, %arg5: memref<2x8xf32, #tpu.memory_space<vmem>>) attributes {dimension_semantics = [#tpu.dimension_semantics<parallel>], iteration_bounds = array<i64: 1>, scalar_prefetch = 0 : i64, scratch_operands = 0 : i64, tpu.core_type = #tpu.core_type<tc>, window_params = [{transform_indices = @transform_0, window_bounds = array<i64: 2, 8>}, {pipeline_mode = #tpu.pipeline_mode<synchronous>, transform_indices = @transform_1, window_bounds = array<i64: 2, 128>}, {pipeline_mode = #tpu.pipeline_mode<synchronous>, transform_indices = @transform_2, window_bounds = array<i64: 32, 169>}, {pipeline_mode = #tpu.pipeline_mode<synchronous>, transform_indices = @transform_3, window_bounds = array<i64: 1, 40>}, {transform_indices = @transform_4, window_bounds = array<i64: 2, 8>}]} {
    %c0 = arith.constant 0 : index
    %c0_0 = arith.constant 0 : index
    %0 = vector.load %arg2[%c0, %c0_0] : memref<2x128xf32, #tpu.memory_space<vmem>>, vector<1x128xf32>
    %c1 = arith.constant 1 : index
    %c0_1 = arith.constant 0 : index
    %1 = vector.load %arg2[%c1, %c0_1] : memref<2x128xf32, #tpu.memory_space<vmem>>, vector<1x128xf32>
    %c0_2 = arith.constant 0 : index
    %c0_3 = arith.constant 0 : index
    %2 = vector.load %arg3[%c0_2, %c0_3] : memref<32x169xf32, #tpu.memory_space<vmem>>, vector<32x128xf32>
    %c0_4 = arith.constant 0 : index
    %c128 = arith.constant 128 : index
    %3 = vector.load %arg3[%c0_4, %c128] : memref<32x169xf32, #tpu.memory_space<vmem>>, vector<32x33xf32>
    %c0_5 = arith.constant 0 : index
    %c161 = arith.constant 161 : index
    %4 = vector.load %arg3[%c0_5, %c161] : memref<32x169xf32, #tpu.memory_space<vmem>>, vector<32x8xf32>
    %c0_6 = arith.constant 0 : index
    %c0_7 = arith.constant 0 : index
    %5 = vector.load %arg4[%c0_6, %c0_7] : memref<1x40xf32, #tpu.memory_space<vmem>>, vector<1x32xf32>
    %c0_8 = arith.constant 0 : index
    %c32 = arith.constant 32 : index
    %6 = vector.load %arg4[%c0_8, %c32] : memref<1x40xf32, #tpu.memory_space<vmem>>, vector<1x8xf32>
    %c0_9 = arith.constant 0 : index
    %c0_10 = arith.constant 0 : index
    %7 = vector.load %arg1[%c0_9, %c0_10] : memref<2x8xf32, #tpu.memory_space<vmem>>, vector<2x8xf32>
    %8 = tpu.iota {dimensions = array<i32: 1>} : vector<2x128xi32>
    %c64_i32 = arith.constant 64 : i32
    %9 = vector.broadcast %c64_i32 : i32 to vector<2x128xi32>
    %10 = arith.cmpi sge, %8, %9 : vector<2x128xi32>
    %c96_i32 = arith.constant 96 : i32
    %11 = vector.broadcast %c96_i32 : i32 to vector<2x128xi32>
    %12 = arith.cmpi slt, %8, %11 : vector<2x128xi32>
    %13 = arith.andi %10, %12 : vector<2x128xi1>
    %cst = arith.constant 0.000000e+00 : f32
    %14 = vector.broadcast %cst : f32 to vector<2x32xf32>
    %cst_11 = arith.constant 0.000000e+00 : f32
    %15 = vector.broadcast %cst_11 : f32 to vector<2x32xf32>
    %16 = vector.extract_strided_slice %7 {offsets = [0, 0], sizes = [2, 1], strides = [1, 1]} : vector<2x8xf32> to vector<2x1xf32>
    %17 = vector.broadcast %16 : vector<2x1xf32> to vector<2x128xf32>
    %18 = vector.broadcast %0 : vector<1x128xf32> to vector<2x128xf32>
    %19 = arith.mulf %17, %18 : vector<2x128xf32>
    %20 = vector.broadcast %1 : vector<1x128xf32> to vector<2x128xf32>
    %21 = arith.addf %19, %20 : vector<2x128xf32>
    %cst_12 = arith.constant dense<0.000000e+00> : vector<2x128xf32>
    %22 = tpu.matmul %14, %2, %cst_12 {dimension_numbers = #tpu.dot_dimension_numbers<[1], [0], [0], [1], [0, 0, 1, 1], [], []>} : vector<2x32xf32>, vector<32x128xf32>, vector<2x128xf32> -> vector<2x128xf32>
    %23 = arith.addf %21, %22 : vector<2x128xf32>
    %24 = math.tanh %23 : vector<2x128xf32>
    %25 = arith.negf %23 : vector<2x128xf32>
    %26 = math.exp %25 : vector<2x128xf32>
    %cst_13 = arith.constant 1.000000e+00 : f32
    %27 = vector.broadcast %cst_13 : f32 to vector<2x128xf32>
    %28 = arith.addf %27, %26 : vector<2x128xf32>
    %29 = arith.divf %27, %28 : vector<2x128xf32>
    %30 = arith.select %13, %24, %29 : vector<2x128xi1>, vector<2x128xf32>
    %31 = vector.extract_strided_slice %30 {offsets = [0, 0], sizes = [2, 32], strides = [1, 1]} : vector<2x128xf32> to vector<2x32xf32>
    %32 = vector.extract_strided_slice %30 {offsets = [0, 32], sizes = [2, 32], strides = [1, 1]} : vector<2x128xf32> to vector<2x32xf32>
    %33 = vector.extract_strided_slice %30 {offsets = [0, 64], sizes = [2, 32], strides = [1, 1]} : vector<2x128xf32> to vector<2x32xf32>
    %34 = vector.extract_strided_slice %30 {offsets = [0, 96], sizes = [2, 32], strides = [1, 1]} : vector<2x128xf32> to vector<2x32xf32>
    %35 = arith.mulf %32, %15 : vector<2x32xf32>
    %36 = arith.mulf %31, %33 : vector<2x32xf32>
    %37 = arith.addf %35, %36 : vector<2x32xf32>
    %38 = math.tanh %37 : vector<2x32xf32>
    %39 = arith.mulf %34, %38 : vector<2x32xf32>
    %cst_14 = arith.constant dense<0.000000e+00> : vector<2x33xf32>
    %40 = tpu.matmul %39, %3, %cst_14 {dimension_numbers = #tpu.dot_dimension_numbers<[1], [0], [0], [1], [0, 0, 1, 1], [], []>} : vector<2x32xf32>, vector<32x33xf32>, vector<2x33xf32> -> vector<2x33xf32>
    %41 = vector.extract_strided_slice %40 {offsets = [0, 0], sizes = [2, 32], strides = [1, 1]} : vector<2x33xf32> to vector<2x32xf32>
    %42 = vector.broadcast %5 : vector<1x32xf32> to vector<2x32xf32>
    %43 = arith.addf %41, %42 : vector<2x32xf32>
    %44 = vector.extract_strided_slice %40 {offsets = [0, 32], sizes = [2, 1], strides = [1, 1]} : vector<2x33xf32> to vector<2x1xf32>
    %45 = vector.extract_strided_slice %7 {offsets = [0, 1], sizes = [2, 1], strides = [1, 1]} : vector<2x8xf32> to vector<2x1xf32>
    %46 = vector.broadcast %45 : vector<2x1xf32> to vector<2x128xf32>
    %47 = vector.broadcast %0 : vector<1x128xf32> to vector<2x128xf32>
    %48 = arith.mulf %46, %47 : vector<2x128xf32>
    %49 = vector.broadcast %1 : vector<1x128xf32> to vector<2x128xf32>
    %50 = arith.addf %48, %49 : vector<2x128xf32>
    %cst_15 = arith.constant dense<0.000000e+00> : vector<2x128xf32>
    %51 = tpu.matmul %39, %2, %cst_15 {dimension_numbers = #tpu.dot_dimension_numbers<[1], [0], [0], [1], [0, 0, 1, 1], [], []>} : vector<2x32xf32>, vector<32x128xf32>, vector<2x128xf32> -> vector<2x128xf32>
    %52 = arith.addf %50, %51 : vector<2x128xf32>
    %53 = math.tanh %52 : vector<2x128xf32>
    %54 = arith.negf %52 : vector<2x128xf32>
    %55 = math.exp %54 : vector<2x128xf32>
    %cst_16 = arith.constant 1.000000e+00 : f32
    %56 = vector.broadcast %cst_16 : f32 to vector<2x128xf32>
    %57 = arith.addf %56, %55 : vector<2x128xf32>
    %58 = arith.divf %56, %57 : vector<2x128xf32>
    %59 = arith.select %13, %53, %58 : vector<2x128xi1>, vector<2x128xf32>
    %60 = vector.extract_strided_slice %59 {offsets = [0, 0], sizes = [2, 32], strides = [1, 1]} : vector<2x128xf32> to vector<2x32xf32>
    %61 = vector.extract_strided_slice %59 {offsets = [0, 32], sizes = [2, 32], strides = [1, 1]} : vector<2x128xf32> to vector<2x32xf32>
    %62 = vector.extract_strided_slice %59 {offsets = [0, 64], sizes = [2, 32], strides = [1, 1]} : vector<2x128xf32> to vector<2x32xf32>
    %63 = vector.extract_strided_slice %59 {offsets = [0, 96], sizes = [2, 32], strides = [1, 1]} : vector<2x128xf32> to vector<2x32xf32>
    %64 = arith.mulf %61, %37 : vector<2x32xf32>
    %65 = arith.mulf %60, %62 : vector<2x32xf32>
    %66 = arith.addf %64, %65 : vector<2x32xf32>
    %67 = math.tanh %66 : vector<2x32xf32>
    %68 = arith.mulf %63, %67 : vector<2x32xf32>
    %cst_17 = arith.constant dense<0.000000e+00> : vector<2x33xf32>
    %69 = tpu.matmul %68, %3, %cst_17 {dimension_numbers = #tpu.dot_dimension_numbers<[1], [0], [0], [1], [0, 0, 1, 1], [], []>} : vector<2x32xf32>, vector<32x33xf32>, vector<2x33xf32> -> vector<2x33xf32>
    %70 = vector.extract_strided_slice %69 {offsets = [0, 0], sizes = [2, 32], strides = [1, 1]} : vector<2x33xf32> to vector<2x32xf32>
    %71 = vector.broadcast %5 : vector<1x32xf32> to vector<2x32xf32>
    %72 = arith.addf %70, %71 : vector<2x32xf32>
    %73 = vector.extract_strided_slice %69 {offsets = [0, 32], sizes = [2, 1], strides = [1, 1]} : vector<2x33xf32> to vector<2x1xf32>
    %74 = vector.extract_strided_slice %7 {offsets = [0, 2], sizes = [2, 1], strides = [1, 1]} : vector<2x8xf32> to vector<2x1xf32>
    %75 = vector.broadcast %74 : vector<2x1xf32> to vector<2x128xf32>
    %76 = vector.broadcast %0 : vector<1x128xf32> to vector<2x128xf32>
    %77 = arith.mulf %75, %76 : vector<2x128xf32>
    %78 = vector.broadcast %1 : vector<1x128xf32> to vector<2x128xf32>
    %79 = arith.addf %77, %78 : vector<2x128xf32>
    %cst_18 = arith.constant dense<0.000000e+00> : vector<2x128xf32>
    %80 = tpu.matmul %68, %2, %cst_18 {dimension_numbers = #tpu.dot_dimension_numbers<[1], [0], [0], [1], [0, 0, 1, 1], [], []>} : vector<2x32xf32>, vector<32x128xf32>, vector<2x128xf32> -> vector<2x128xf32>
    %81 = arith.addf %79, %80 : vector<2x128xf32>
    %82 = math.tanh %81 : vector<2x128xf32>
    %83 = arith.negf %81 : vector<2x128xf32>
    %84 = math.exp %83 : vector<2x128xf32>
    %cst_19 = arith.constant 1.000000e+00 : f32
    %85 = vector.broadcast %cst_19 : f32 to vector<2x128xf32>
    %86 = arith.addf %85, %84 : vector<2x128xf32>
    %87 = arith.divf %85, %86 : vector<2x128xf32>
    %88 = arith.select %13, %82, %87 : vector<2x128xi1>, vector<2x128xf32>
    %89 = vector.extract_strided_slice %88 {offsets = [0, 0], sizes = [2, 32], strides = [1, 1]} : vector<2x128xf32> to vector<2x32xf32>
    %90 = vector.extract_strided_slice %88 {offsets = [0, 32], sizes = [2, 32], strides = [1, 1]} : vector<2x128xf32> to vector<2x32xf32>
    %91 = vector.extract_strided_slice %88 {offsets = [0, 64], sizes = [2, 32], strides = [1, 1]} : vector<2x128xf32> to vector<2x32xf32>
    %92 = vector.extract_strided_slice %88 {offsets = [0, 96], sizes = [2, 32], strides = [1, 1]} : vector<2x128xf32> to vector<2x32xf32>
    %93 = arith.mulf %90, %66 : vector<2x32xf32>
    %94 = arith.mulf %89, %91 : vector<2x32xf32>
    %95 = arith.addf %93, %94 : vector<2x32xf32>
    %96 = math.tanh %95 : vector<2x32xf32>
    %97 = arith.mulf %92, %96 : vector<2x32xf32>
    %cst_20 = arith.constant dense<0.000000e+00> : vector<2x33xf32>
    %98 = tpu.matmul %97, %3, %cst_20 {dimension_numbers = #tpu.dot_dimension_numbers<[1], [0], [0], [1], [0, 0, 1, 1], [], []>} : vector<2x32xf32>, vector<32x33xf32>, vector<2x33xf32> -> vector<2x33xf32>
    %99 = vector.extract_strided_slice %98 {offsets = [0, 0], sizes = [2, 32], strides = [1, 1]} : vector<2x33xf32> to vector<2x32xf32>
    %100 = vector.broadcast %5 : vector<1x32xf32> to vector<2x32xf32>
    %101 = arith.addf %99, %100 : vector<2x32xf32>
    %102 = vector.extract_strided_slice %98 {offsets = [0, 32], sizes = [2, 1], strides = [1, 1]} : vector<2x33xf32> to vector<2x1xf32>
    %103 = vector.extract_strided_slice %7 {offsets = [0, 3], sizes = [2, 1], strides = [1, 1]} : vector<2x8xf32> to vector<2x1xf32>
    %104 = vector.broadcast %103 : vector<2x1xf32> to vector<2x128xf32>
    %105 = vector.broadcast %0 : vector<1x128xf32> to vector<2x128xf32>
    %106 = arith.mulf %104, %105 : vector<2x128xf32>
    %107 = vector.broadcast %1 : vector<1x128xf32> to vector<2x128xf32>
    %108 = arith.addf %106, %107 : vector<2x128xf32>
    %cst_21 = arith.constant dense<0.000000e+00> : vector<2x128xf32>
    %109 = tpu.matmul %97, %2, %cst_21 {dimension_numbers = #tpu.dot_dimension_numbers<[1], [0], [0], [1], [0, 0, 1, 1], [], []>} : vector<2x32xf32>, vector<32x128xf32>, vector<2x128xf32> -> vector<2x128xf32>
    %110 = arith.addf %108, %109 : vector<2x128xf32>
    %111 = math.tanh %110 : vector<2x128xf32>
    %112 = arith.negf %110 : vector<2x128xf32>
    %113 = math.exp %112 : vector<2x128xf32>
    %cst_22 = arith.constant 1.000000e+00 : f32
    %114 = vector.broadcast %cst_22 : f32 to vector<2x128xf32>
    %115 = arith.addf %114, %113 : vector<2x128xf32>
    %116 = arith.divf %114, %115 : vector<2x128xf32>
    %117 = arith.select %13, %111, %116 : vector<2x128xi1>, vector<2x128xf32>
    %118 = vector.extract_strided_slice %117 {offsets = [0, 0], sizes = [2, 32], strides = [1, 1]} : vector<2x128xf32> to vector<2x32xf32>
    %119 = vector.extract_strided_slice %117 {offsets = [0, 32], sizes = [2, 32], strides = [1, 1]} : vector<2x128xf32> to vector<2x32xf32>
    %120 = vector.extract_strided_slice %117 {offsets = [0, 64], sizes = [2, 32], strides = [1, 1]} : vector<2x128xf32> to vector<2x32xf32>
    %121 = vector.extract_strided_slice %117 {offsets = [0, 96], sizes = [2, 32], strides = [1, 1]} : vector<2x128xf32> to vector<2x32xf32>
    %122 = arith.mulf %119, %95 : vector<2x32xf32>
    %123 = arith.mulf %118, %120 : vector<2x32xf32>
    %124 = arith.addf %122, %123 : vector<2x32xf32>
    %125 = math.tanh %124 : vector<2x32xf32>
    %126 = arith.mulf %121, %125 : vector<2x32xf32>
    %cst_23 = arith.constant dense<0.000000e+00> : vector<2x33xf32>
    %127 = tpu.matmul %126, %3, %cst_23 {dimension_numbers = #tpu.dot_dimension_numbers<[1], [0], [0], [1], [0, 0, 1, 1], [], []>} : vector<2x32xf32>, vector<32x33xf32>, vector<2x33xf32> -> vector<2x33xf32>
    %128 = vector.extract_strided_slice %127 {offsets = [0, 0], sizes = [2, 32], strides = [1, 1]} : vector<2x33xf32> to vector<2x32xf32>
    %129 = vector.broadcast %5 : vector<1x32xf32> to vector<2x32xf32>
    %130 = arith.addf %128, %129 : vector<2x32xf32>
    %131 = vector.extract_strided_slice %127 {offsets = [0, 32], sizes = [2, 1], strides = [1, 1]} : vector<2x33xf32> to vector<2x1xf32>
    %132 = vector.extract_strided_slice %7 {offsets = [0, 4], sizes = [2, 1], strides = [1, 1]} : vector<2x8xf32> to vector<2x1xf32>
    %133 = vector.broadcast %132 : vector<2x1xf32> to vector<2x128xf32>
    %134 = vector.broadcast %0 : vector<1x128xf32> to vector<2x128xf32>
    %135 = arith.mulf %133, %134 : vector<2x128xf32>
    %136 = vector.broadcast %1 : vector<1x128xf32> to vector<2x128xf32>
    %137 = arith.addf %135, %136 : vector<2x128xf32>
    %cst_24 = arith.constant dense<0.000000e+00> : vector<2x128xf32>
    %138 = tpu.matmul %126, %2, %cst_24 {dimension_numbers = #tpu.dot_dimension_numbers<[1], [0], [0], [1], [0, 0, 1, 1], [], []>} : vector<2x32xf32>, vector<32x128xf32>, vector<2x128xf32> -> vector<2x128xf32>
    %139 = arith.addf %137, %138 : vector<2x128xf32>
    %140 = math.tanh %139 : vector<2x128xf32>
    %141 = arith.negf %139 : vector<2x128xf32>
    %142 = math.exp %141 : vector<2x128xf32>
    %cst_25 = arith.constant 1.000000e+00 : f32
    %143 = vector.broadcast %cst_25 : f32 to vector<2x128xf32>
    %144 = arith.addf %143, %142 : vector<2x128xf32>
    %145 = arith.divf %143, %144 : vector<2x128xf32>
    %146 = arith.select %13, %140, %145 : vector<2x128xi1>, vector<2x128xf32>
    %147 = vector.extract_strided_slice %146 {offsets = [0, 0], sizes = [2, 32], strides = [1, 1]} : vector<2x128xf32> to vector<2x32xf32>
    %148 = vector.extract_strided_slice %146 {offsets = [0, 32], sizes = [2, 32], strides = [1, 1]} : vector<2x128xf32> to vector<2x32xf32>
    %149 = vector.extract_strided_slice %146 {offsets = [0, 64], sizes = [2, 32], strides = [1, 1]} : vector<2x128xf32> to vector<2x32xf32>
    %150 = vector.extract_strided_slice %146 {offsets = [0, 96], sizes = [2, 32], strides = [1, 1]} : vector<2x128xf32> to vector<2x32xf32>
    %151 = arith.mulf %148, %124 : vector<2x32xf32>
    %152 = arith.mulf %147, %149 : vector<2x32xf32>
    %153 = arith.addf %151, %152 : vector<2x32xf32>
    %154 = math.tanh %153 : vector<2x32xf32>
    %155 = arith.mulf %150, %154 : vector<2x32xf32>
    %cst_26 = arith.constant dense<0.000000e+00> : vector<2x33xf32>
    %156 = tpu.matmul %155, %3, %cst_26 {dimension_numbers = #tpu.dot_dimension_numbers<[1], [0], [0], [1], [0, 0, 1, 1], [], []>} : vector<2x32xf32>, vector<32x33xf32>, vector<2x33xf32> -> vector<2x33xf32>
    %157 = vector.extract_strided_slice %156 {offsets = [0, 0], sizes = [2, 32], strides = [1, 1]} : vector<2x33xf32> to vector<2x32xf32>
    %158 = vector.broadcast %5 : vector<1x32xf32> to vector<2x32xf32>
    %159 = arith.addf %157, %158 : vector<2x32xf32>
    %160 = vector.extract_strided_slice %156 {offsets = [0, 32], sizes = [2, 1], strides = [1, 1]} : vector<2x33xf32> to vector<2x1xf32>
    %161 = vector.extract_strided_slice %7 {offsets = [0, 5], sizes = [2, 1], strides = [1, 1]} : vector<2x8xf32> to vector<2x1xf32>
    %162 = vector.broadcast %161 : vector<2x1xf32> to vector<2x128xf32>
    %163 = vector.broadcast %0 : vector<1x128xf32> to vector<2x128xf32>
    %164 = arith.mulf %162, %163 : vector<2x128xf32>
    %165 = vector.broadcast %1 : vector<1x128xf32> to vector<2x128xf32>
    %166 = arith.addf %164, %165 : vector<2x128xf32>
    %cst_27 = arith.constant dense<0.000000e+00> : vector<2x128xf32>
    %167 = tpu.matmul %155, %2, %cst_27 {dimension_numbers = #tpu.dot_dimension_numbers<[1], [0], [0], [1], [0, 0, 1, 1], [], []>} : vector<2x32xf32>, vector<32x128xf32>, vector<2x128xf32> -> vector<2x128xf32>
    %168 = arith.addf %166, %167 : vector<2x128xf32>
    %169 = math.tanh %168 : vector<2x128xf32>
    %170 = arith.negf %168 : vector<2x128xf32>
    %171 = math.exp %170 : vector<2x128xf32>
    %cst_28 = arith.constant 1.000000e+00 : f32
    %172 = vector.broadcast %cst_28 : f32 to vector<2x128xf32>
    %173 = arith.addf %172, %171 : vector<2x128xf32>
    %174 = arith.divf %172, %173 : vector<2x128xf32>
    %175 = arith.select %13, %169, %174 : vector<2x128xi1>, vector<2x128xf32>
    %176 = vector.extract_strided_slice %175 {offsets = [0, 0], sizes = [2, 32], strides = [1, 1]} : vector<2x128xf32> to vector<2x32xf32>
    %177 = vector.extract_strided_slice %175 {offsets = [0, 32], sizes = [2, 32], strides = [1, 1]} : vector<2x128xf32> to vector<2x32xf32>
    %178 = vector.extract_strided_slice %175 {offsets = [0, 64], sizes = [2, 32], strides = [1, 1]} : vector<2x128xf32> to vector<2x32xf32>
    %179 = vector.extract_strided_slice %175 {offsets = [0, 96], sizes = [2, 32], strides = [1, 1]} : vector<2x128xf32> to vector<2x32xf32>
    %180 = arith.mulf %177, %153 : vector<2x32xf32>
    %181 = arith.mulf %176, %178 : vector<2x32xf32>
    %182 = arith.addf %180, %181 : vector<2x32xf32>
    %183 = math.tanh %182 : vector<2x32xf32>
    %184 = arith.mulf %179, %183 : vector<2x32xf32>
    %cst_29 = arith.constant dense<0.000000e+00> : vector<2x33xf32>
    %185 = tpu.matmul %184, %3, %cst_29 {dimension_numbers = #tpu.dot_dimension_numbers<[1], [0], [0], [1], [0, 0, 1, 1], [], []>} : vector<2x32xf32>, vector<32x33xf32>, vector<2x33xf32> -> vector<2x33xf32>
    %186 = vector.extract_strided_slice %185 {offsets = [0, 0], sizes = [2, 32], strides = [1, 1]} : vector<2x33xf32> to vector<2x32xf32>
    %187 = vector.broadcast %5 : vector<1x32xf32> to vector<2x32xf32>
    %188 = arith.addf %186, %187 : vector<2x32xf32>
    %189 = vector.extract_strided_slice %185 {offsets = [0, 32], sizes = [2, 1], strides = [1, 1]} : vector<2x33xf32> to vector<2x1xf32>
    %190 = vector.extract_strided_slice %7 {offsets = [0, 6], sizes = [2, 1], strides = [1, 1]} : vector<2x8xf32> to vector<2x1xf32>
    %191 = vector.broadcast %190 : vector<2x1xf32> to vector<2x128xf32>
    %192 = vector.broadcast %0 : vector<1x128xf32> to vector<2x128xf32>
    %193 = arith.mulf %191, %192 : vector<2x128xf32>
    %194 = vector.broadcast %1 : vector<1x128xf32> to vector<2x128xf32>
    %195 = arith.addf %193, %194 : vector<2x128xf32>
    %cst_30 = arith.constant dense<0.000000e+00> : vector<2x128xf32>
    %196 = tpu.matmul %184, %2, %cst_30 {dimension_numbers = #tpu.dot_dimension_numbers<[1], [0], [0], [1], [0, 0, 1, 1], [], []>} : vector<2x32xf32>, vector<32x128xf32>, vector<2x128xf32> -> vector<2x128xf32>
    %197 = arith.addf %195, %196 : vector<2x128xf32>
    %198 = math.tanh %197 : vector<2x128xf32>
    %199 = arith.negf %197 : vector<2x128xf32>
    %200 = math.exp %199 : vector<2x128xf32>
    %cst_31 = arith.constant 1.000000e+00 : f32
    %201 = vector.broadcast %cst_31 : f32 to vector<2x128xf32>
    %202 = arith.addf %201, %200 : vector<2x128xf32>
    %203 = arith.divf %201, %202 : vector<2x128xf32>
    %204 = arith.select %13, %198, %203 : vector<2x128xi1>, vector<2x128xf32>
    %205 = vector.extract_strided_slice %204 {offsets = [0, 0], sizes = [2, 32], strides = [1, 1]} : vector<2x128xf32> to vector<2x32xf32>
    %206 = vector.extract_strided_slice %204 {offsets = [0, 32], sizes = [2, 32], strides = [1, 1]} : vector<2x128xf32> to vector<2x32xf32>
    %207 = vector.extract_strided_slice %204 {offsets = [0, 64], sizes = [2, 32], strides = [1, 1]} : vector<2x128xf32> to vector<2x32xf32>
    %208 = vector.extract_strided_slice %204 {offsets = [0, 96], sizes = [2, 32], strides = [1, 1]} : vector<2x128xf32> to vector<2x32xf32>
    %209 = arith.mulf %206, %182 : vector<2x32xf32>
    %210 = arith.mulf %205, %207 : vector<2x32xf32>
    %211 = arith.addf %209, %210 : vector<2x32xf32>
    %212 = math.tanh %211 : vector<2x32xf32>
    %213 = arith.mulf %208, %212 : vector<2x32xf32>
    %cst_32 = arith.constant dense<0.000000e+00> : vector<2x33xf32>
    %214 = tpu.matmul %213, %3, %cst_32 {dimension_numbers = #tpu.dot_dimension_numbers<[1], [0], [0], [1], [0, 0, 1, 1], [], []>} : vector<2x32xf32>, vector<32x33xf32>, vector<2x33xf32> -> vector<2x33xf32>
    %215 = vector.extract_strided_slice %214 {offsets = [0, 0], sizes = [2, 32], strides = [1, 1]} : vector<2x33xf32> to vector<2x32xf32>
    %216 = vector.broadcast %5 : vector<1x32xf32> to vector<2x32xf32>
    %217 = arith.addf %215, %216 : vector<2x32xf32>
    %218 = vector.extract_strided_slice %214 {offsets = [0, 32], sizes = [2, 1], strides = [1, 1]} : vector<2x33xf32> to vector<2x1xf32>
    %219 = vector.extract_strided_slice %7 {offsets = [0, 7], sizes = [2, 1], strides = [1, 1]} : vector<2x8xf32> to vector<2x1xf32>
    %220 = vector.broadcast %219 : vector<2x1xf32> to vector<2x128xf32>
    %221 = vector.broadcast %0 : vector<1x128xf32> to vector<2x128xf32>
    %222 = arith.mulf %220, %221 : vector<2x128xf32>
    %223 = vector.broadcast %1 : vector<1x128xf32> to vector<2x128xf32>
    %224 = arith.addf %222, %223 : vector<2x128xf32>
    %cst_33 = arith.constant dense<0.000000e+00> : vector<2x128xf32>
    %225 = tpu.matmul %213, %2, %cst_33 {dimension_numbers = #tpu.dot_dimension_numbers<[1], [0], [0], [1], [0, 0, 1, 1], [], []>} : vector<2x32xf32>, vector<32x128xf32>, vector<2x128xf32> -> vector<2x128xf32>
    %226 = arith.addf %224, %225 : vector<2x128xf32>
    %227 = math.tanh %226 : vector<2x128xf32>
    %228 = arith.negf %226 : vector<2x128xf32>
    %229 = math.exp %228 : vector<2x128xf32>
    %cst_34 = arith.constant 1.000000e+00 : f32
    %230 = vector.broadcast %cst_34 : f32 to vector<2x128xf32>
    %231 = arith.addf %230, %229 : vector<2x128xf32>
    %232 = arith.divf %230, %231 : vector<2x128xf32>
    %233 = arith.select %13, %227, %232 : vector<2x128xi1>, vector<2x128xf32>
    %234 = vector.extract_strided_slice %233 {offsets = [0, 0], sizes = [2, 32], strides = [1, 1]} : vector<2x128xf32> to vector<2x32xf32>
    %235 = vector.extract_strided_slice %233 {offsets = [0, 32], sizes = [2, 32], strides = [1, 1]} : vector<2x128xf32> to vector<2x32xf32>
    %236 = vector.extract_strided_slice %233 {offsets = [0, 64], sizes = [2, 32], strides = [1, 1]} : vector<2x128xf32> to vector<2x32xf32>
    %237 = vector.extract_strided_slice %233 {offsets = [0, 96], sizes = [2, 32], strides = [1, 1]} : vector<2x128xf32> to vector<2x32xf32>
    %238 = arith.mulf %235, %211 : vector<2x32xf32>
    %239 = arith.mulf %234, %236 : vector<2x32xf32>
    %240 = arith.addf %238, %239 : vector<2x32xf32>
    %241 = math.tanh %240 : vector<2x32xf32>
    %242 = arith.mulf %237, %241 : vector<2x32xf32>
    %cst_35 = arith.constant dense<0.000000e+00> : vector<2x33xf32>
    %243 = tpu.matmul %242, %3, %cst_35 {dimension_numbers = #tpu.dot_dimension_numbers<[1], [0], [0], [1], [0, 0, 1, 1], [], []>} : vector<2x32xf32>, vector<32x33xf32>, vector<2x33xf32> -> vector<2x33xf32>
    %244 = vector.extract_strided_slice %243 {offsets = [0, 0], sizes = [2, 32], strides = [1, 1]} : vector<2x33xf32> to vector<2x32xf32>
    %245 = vector.broadcast %5 : vector<1x32xf32> to vector<2x32xf32>
    %246 = arith.addf %244, %245 : vector<2x32xf32>
    %247 = vector.extract_strided_slice %243 {offsets = [0, 32], sizes = [2, 1], strides = [1, 1]} : vector<2x33xf32> to vector<2x1xf32>
    %248 = tpu.concatenate %44, %73, %102, %131, %160, %189, %218, %247 in 1 : vector<2x1xf32>, vector<2x1xf32>, vector<2x1xf32>, vector<2x1xf32>, vector<2x1xf32>, vector<2x1xf32>, vector<2x1xf32>, vector<2x1xf32> -> vector<2x8xf32>
    %cst_36 = arith.constant dense<0xFF800000> : vector<2xf32>
    %249 = vector.multi_reduction <maximumf>, %248, %cst_36 [1] : vector<2x8xf32> to vector<2xf32>
    %250 = vector.shape_cast %249 : vector<2xf32> to vector<2x1xf32>
    %251 = vector.broadcast %250 : vector<2x1xf32> to vector<2x8xf32>
    %252 = arith.subf %248, %251 : vector<2x8xf32>
    %253 = math.exp %252 : vector<2x8xf32>
    %cst_37 = arith.constant dense<0.000000e+00> : vector<2xf32>
    %254 = vector.multi_reduction <add>, %253, %cst_37 [1] : vector<2x8xf32> to vector<2xf32>
    %255 = vector.shape_cast %254 : vector<2xf32> to vector<2x1xf32>
    %256 = tpu.reciprocal %255 {approx = true} : vector<2x1xf32> -> vector<2x1xf32>
    %257 = vector.broadcast %256 : vector<2x1xf32> to vector<2x8xf32>
    %258 = arith.mulf %253, %257 : vector<2x8xf32>
    %259 = vector.extract_strided_slice %258 {offsets = [0, 0], sizes = [2, 1], strides = [1, 1]} : vector<2x8xf32> to vector<2x1xf32>
    %260 = vector.broadcast %259 : vector<2x1xf32> to vector<2x32xf32>
    %261 = arith.mulf %260, %43 : vector<2x32xf32>
    %262 = vector.extract_strided_slice %258 {offsets = [0, 1], sizes = [2, 1], strides = [1, 1]} : vector<2x8xf32> to vector<2x1xf32>
    %263 = vector.broadcast %262 : vector<2x1xf32> to vector<2x32xf32>
    %264 = arith.mulf %263, %72 : vector<2x32xf32>
    %265 = vector.extract_strided_slice %258 {offsets = [0, 2], sizes = [2, 1], strides = [1, 1]} : vector<2x8xf32> to vector<2x1xf32>
    %266 = vector.broadcast %265 : vector<2x1xf32> to vector<2x32xf32>
    %267 = arith.mulf %266, %101 : vector<2x32xf32>
    %268 = vector.extract_strided_slice %258 {offsets = [0, 3], sizes = [2, 1], strides = [1, 1]} : vector<2x8xf32> to vector<2x1xf32>
    %269 = vector.broadcast %268 : vector<2x1xf32> to vector<2x32xf32>
    %270 = arith.mulf %269, %130 : vector<2x32xf32>
    %271 = vector.extract_strided_slice %258 {offsets = [0, 4], sizes = [2, 1], strides = [1, 1]} : vector<2x8xf32> to vector<2x1xf32>
    %272 = vector.broadcast %271 : vector<2x1xf32> to vector<2x32xf32>
    %273 = arith.mulf %272, %159 : vector<2x32xf32>
    %274 = vector.extract_strided_slice %258 {offsets = [0, 5], sizes = [2, 1], strides = [1, 1]} : vector<2x8xf32> to vector<2x1xf32>
    %275 = vector.broadcast %274 : vector<2x1xf32> to vector<2x32xf32>
    %276 = arith.mulf %275, %188 : vector<2x32xf32>
    %277 = vector.extract_strided_slice %258 {offsets = [0, 6], sizes = [2, 1], strides = [1, 1]} : vector<2x8xf32> to vector<2x1xf32>
    %278 = vector.broadcast %277 : vector<2x1xf32> to vector<2x32xf32>
    %279 = arith.mulf %278, %217 : vector<2x32xf32>
    %280 = vector.extract_strided_slice %258 {offsets = [0, 7], sizes = [2, 1], strides = [1, 1]} : vector<2x8xf32> to vector<2x1xf32>
    %281 = vector.broadcast %280 : vector<2x1xf32> to vector<2x32xf32>
    %282 = arith.mulf %281, %246 : vector<2x32xf32>
    %283 = arith.addf %261, %264 : vector<2x32xf32>
    %284 = arith.addf %267, %270 : vector<2x32xf32>
    %285 = arith.addf %273, %276 : vector<2x32xf32>
    %286 = arith.addf %279, %282 : vector<2x32xf32>
    %287 = arith.addf %283, %284 : vector<2x32xf32>
    %288 = arith.addf %285, %286 : vector<2x32xf32>
    %289 = arith.addf %287, %288 : vector<2x32xf32>
    %cst_38 = arith.constant dense<0.000000e+00> : vector<2x8xf32>
    %290 = tpu.matmul %289, %4, %cst_38 {dimension_numbers = #tpu.dot_dimension_numbers<[1], [0], [0], [1], [0, 0, 1, 1], [], []>} : vector<2x32xf32>, vector<32x8xf32>, vector<2x8xf32> -> vector<2x8xf32>
    %291 = vector.broadcast %6 : vector<1x8xf32> to vector<2x8xf32>
    %292 = arith.addf %290, %291 : vector<2x8xf32>
    %c0_39 = arith.constant 0 : index
    %c0_40 = arith.constant 0 : index
    %293 = vector.load %arg5[%c0_39, %c0_40] : memref<2x8xf32, #tpu.memory_space<vmem>>, vector<2x8xf32>
    tpu.vector_store %arg5[%c0_39, %c0_40], %292 {strides = array<i32>} : memref<2x8xf32, #tpu.memory_space<vmem>>, vector<2x8xf32>,
    return
  }
  func.func @transform_0(%arg0: i32) -> (i32, i32) {
    %c0_i32 = arith.constant 0 : i32
    %c0_i32_0 = arith.constant 0 : i32
    return %arg0, %c0_i32 : i32, i32
  }
  func.func @transform_1(%arg0: i32) -> (i32, i32) {
    %c0_i32 = arith.constant 0 : i32
    %c0_i32_0 = arith.constant 0 : i32
    %c0_i32_1 = arith.constant 0 : i32
    return %c0_i32, %c0_i32_0 : i32, i32
  }
  func.func @transform_2(%arg0: i32) -> (i32, i32) {
    %c0_i32 = arith.constant 0 : i32
    %c0_i32_0 = arith.constant 0 : i32
    %c0_i32_1 = arith.constant 0 : i32
    return %c0_i32, %c0_i32_0 : i32, i32
  }
  func.func @transform_3(%arg0: i32) -> (i32, i32) {
    %c0_i32 = arith.constant 0 : i32
    %c0_i32_0 = arith.constant 0 : i32
    %c0_i32_1 = arith.constant 0 : i32
    return %c0_i32, %c0_i32_0 : i32, i32
  }
  func.func @transform_4(%arg0: i32) -> (i32, i32) {
    %c0_i32 = arith.constant 0 : i32
    %c0_i32_0 = arith.constant 0 : i32
    return %arg0, %c0_i32 : i32, i32
  }
}

</mosaic_0001>

<llo_original>
// kernel: tpu_custom_call.1
$region0: #{tpu_custom_call.1}
  #allocation0 [shape = 'u32[]', space=smem, size = 0x4, offset = 0x4, fixed_abs, tag = 'smem constant byte address 0x4 - core index']
  #allocation1 [shape = 'u32[72,128]{1,0:T(1,128)}', space=vmem, size = 0x9000, scoped, tag = 'internal scratch']
  %s0 = inlined_call_operand.hbm [shape: f32[2,8], index: 0, kind: input, shape index: {}]
  %s1 = inlined_call_operand.hbm [shape: f32[2,128], index: 1, kind: input, shape index: {}]
  %s2 = inlined_call_operand.hbm [shape: f32[32,169], index: 2, kind: input, shape index: {}]
  %s3 = inlined_call_operand.vmem [shape: f32[1,40], index: 3, kind: input, shape index: {}]
  %s4 = inlined_call_operand.hbm [shape: f32[2,8], index: 4, kind: output, shape index: {}]
  %s5 = sld [smem:[#allocation0]]
  $region38: #{tpu_custom_call.1} parent=0
    _
  %s7 = ssub.s32 1, %s5
  %s8 = scalar_select 0, %s7, %s5
  $region1: #{tpu_custom_call.1} parent=0
    #allocation2 [shape = 'u8[1024]{0}', space=vmem, size = 0x400, scoped, tag = 'input window, operand 0, single buffered']
    #allocation3 [shape = 's32[1]{0}', space=sflag, size = 0x4, scoped, tag = 'scoped memory for tpu_custom_call.1']
    #allocation4 [shape = 's32[1]{0}', space=sflag, size = 0x4, scoped, tag = 'scoped memory for tpu_custom_call.1']
    #allocation5 [shape = 'u8[1024]{0}', space=vmem, size = 0x400, scoped, tag = 'input window, operand 1, single buffered']
    #allocation6 [shape = 's32[1]{0}', space=sflag, size = 0x4, scoped, tag = 'scoped memory for tpu_custom_call.1']
    #allocation7 [shape = 'u8[32768]{0}', space=vmem, size = 0x8000, scoped, tag = 'input window, operand 2, single buffered']
    #allocation8 [shape = 'u8[1024]{0}', space=vmem, size = 0x400, scoped, tag = 'output window, operand 0, single buffered']
    %9 = vsyncpa [#allocation3], 0
    %10 = vsyncpa [#allocation6], 0
    %11 = vsyncpa [#allocation4], 0
    // Predicated region
    $region2: #{tpu_custom_call.1} parent=1 // pred_check
      _
    $region3: #{tpu_custom_call.1} parent=1 // pred_check_branch
      %13 = sbr.rel (0) target = $region5
    $region4: #{tpu_custom_call.1} parent=1 // pred_region
      %15 = vsyncadd [#allocation3], 0
      %s17 = sshll.u32 %s0, 4
      %s18 = int_to_ptr.hbm [resolvable:$true] %s17
      %s19 = sshll.u32 [#allocation2], 4
      %s20 = int_to_ptr.vmem [resolvable:$true] %s19
      %22 = dma.hbm_to_vmem [thread:$0]  %s18, 32, %s20, [#allocation3]
    $region5: #{tpu_custom_call.1} parent=1 // pred_fallthru
      _
    // Predicated region
    $region6: #{tpu_custom_call.1} parent=1 // pred_check
      _
    $region7: #{tpu_custom_call.1} parent=1 // pred_check_branch
      %24 = sbr.rel (0) target = $region9
    $region8: #{tpu_custom_call.1} parent=1 // pred_region
      %26 = vsyncadd [#allocation6], 0
      %s28 = sshll.u32 %s1, 4
      %s29 = int_to_ptr.hbm [resolvable:$true] %s28
      %s30 = sshll.u32 [#allocation5], 4
      %s31 = int_to_ptr.vmem [resolvable:$true] %s30
      %33 = dma.hbm_to_vmem [thread:$0]  %s29, 32, %s31, [#allocation6]
    $region9: #{tpu_custom_call.1} parent=1 // pred_fallthru
      _
    // Predicated region
    $region10: #{tpu_custom_call.1} parent=1 // pred_check
      _
    $region11: #{tpu_custom_call.1} parent=1 // pred_check_branch
      %35 = sbr.rel (0) target = $region13
    $region12: #{tpu_custom_call.1} parent=1 // pred_region
      %37 = vsyncadd [#allocation6], 0
      %s38 = sshll.u32 %s2, 4
      %s39 = int_to_ptr.hbm [resolvable:$true] %s38
      %s40 = sshll.u32 [#allocation7], 4
      %s41 = int_to_ptr.vmem [resolvable:$true] %s40
      %46 = dma.hbm_to_vmem [thread:$0]  %s39, 1024, %s41, [#allocation6], 256, 256, 16
    $region13: #{tpu_custom_call.1} parent=1 // pred_fallthru
      _
    // Predicated region
    $region14: #{tpu_custom_call.1} parent=1 // pred_check
      _
    $region15: #{tpu_custom_call.1} parent=1 // pred_check_branch
      %48 = sbr.rel (0) target = $region17
    $region16: #{tpu_custom_call.1} parent=1 // pred_region
      _
    $region17: #{tpu_custom_call.1} parent=1 // pred_fallthru
      _
    // Predicated region
    $region18: #{tpu_custom_call.1} parent=1 // pred_check
      _
    $region19: #{tpu_custom_call.1} parent=1 // pred_check_branch
      %50 = sbr.rel (0) target = $region21
    $region20: #{tpu_custom_call.1} parent=1 // pred_region
      %52 = dma.done [#allocation3], 32
    $region21: #{tpu_custom_call.1} parent=1 // pred_fallthru
      _
    // Predicated region
    $region22: #{tpu_custom_call.1} parent=1 // pred_check
      _
    $region23: #{tpu_custom_call.1} parent=1 // pred_check_branch
      %54 = sbr.rel (0) target = $region25
    $region24: #{tpu_custom_call.1} parent=1 // pred_region
      %56 = dma.done [#allocation6], 32
    $region25: #{tpu_custom_call.1} parent=1 // pred_fallthru
      _
    // Predicated region
    $region26: #{tpu_custom_call.1} parent=1 // pred_check
      _
    $region27: #{tpu_custom_call.1} parent=1 // pred_check_branch
      %58 = sbr.rel (0) target = $region29
    $region28: #{tpu_custom_call.1} parent=1 // pred_region
      %60 = dma.done [#allocation6], 1024
    $region29: #{tpu_custom_call.1} parent=1 // pred_fallthru
      _
    %v61 = vld [vmem:[#allocation5] sm:$0x1]
    %v62 = vld [vmem:[#allocation5 + $0x1] sm:$0x1]
    %v63 = vld [vmem:[#allocation7] sm:$0xff]
    %v64 = vld [vmem:[#allocation7 + $0x10] sm:$0xff]
    %v65 = vld [vmem:[#allocation7 + $0x20] sm:$0xff]
    %v66 = vld [vmem:[#allocation7 + $0x30] sm:$0xff]
    %v67 = vld [vmem:[#allocation7 + $0x8] sm:$0xff]
    %v68 = vld [vmem:[#allocation7 + $0x18] sm:$0xff]
    %v69 = vld [vmem:[#allocation7 + $0x28] sm:$0xff]
    %v70 = vld [vmem:[#allocation7 + $0x38] sm:$0xff]
    %v71 = vld [vmem:[%s3] sm:$0x1]
    %v72 = vld [vmem:[#allocation2] sm:$0x3]
    %v73 = vlaneseq
    %v74 = vand.u32 %v73, 127
    %vm75 = vcmp.ge.s32.totalorder %v74, 64
    %vm76 = vcmp.lt.s32.totalorder %v74, 96
    %vm77 = vmand %vm75, %vm76
    %79 = vset.pattern.permute.xlu0 0
    %80 = vperm.xlu0 %79, %v72
    %v81 = vpop.permute.xlu0 %80
    %v83 = vperm.slane %v61, 0
    %v84 = vmul.f32 %v81, %v83
    %v85 = vperm.slane %v62, 0
    %v86 = vadd.f32 %v84, %v85
    %vm87 = vcmask 261120
    %v89 = vsel %vm87, 0.0, 0
    %91 = vmatpush.msra.mxu0 0.0
    %92 = vmatpush.msra.mxu0 0.0
    %93 = vmatpush.msra.mxu0 0.0
    %94 = vmatpush.msra.mxu0 0.0
    %95 = vmatpush.msra.mxu0 0.0
    %96 = vmatpush.msra.mxu0 0.0
    %97 = vmatpush.msra.mxu0 0.0
    %98 = vmatpush.msra.mxu0 0.0
    %99 = vmatpush.msra.mxu0 0.0
    %100 = vmatpush.msra.mxu0 0.0
    %101 = vmatpush.msra.mxu0 0.0
    %102 = vmatpush.msra.mxu0 0.0
    %103 = vmatpush.msra.mxu0 %v66
    %104 = vmatpush.msra.mxu0 %v65
    %105 = vmatpush.msra.mxu0 %v64
    %106 = vmatpush.msra.mxu0 %v63
    %107 = vmatmul.f32.gmra.mxu0 %v89
    %v108 = vpop.f32.mrf.mxu0
    %v109 = vadd.f32 0.0, %v108
    %110 = vdwg.mxu0
    %v111 = vadd.f32 %v86, %v109
    %v112 = vtanh.pop %v111
    %v113 = vxor.u32 %v111, 2147483648
    %v114 = vmul.f32 %v113, 1.442695
    %v115 = vpow.pop %v114
    %v116 = vadd.f32 %v115, 1.0
    %v117 = vrcp.pop %v116
    %v118 = vmul.f32 %v116, %v117
    %v119 = vsub.f32 1.0, %v118
    %v120 = vmul.f32 %v117, %v119
    %v121 = vadd.f32 %v117, %v120
    %vm122 = vweird.f32 %v116
    %vm123 = vweird.f32 %v117
    %vm124 = vmor %vm122, %vm123
    %v125 = vsel %vm124, %v117, %v121
    %v126 = vand.u32 2147483647, %v116
    %vm127 = vcmp.eq.f32.partialorder %v126, 8.507059e+37
    %v128 = vand.u32 %v116, 2147483648
    %v129 = vor.u32 1.1754944e-38, %v128
    %v130 = vsel %vm127, %v129, %v125
    %v131 = vmul.f32 1.0, %v130
    %v132 = vsel %vm77, %v112, %v131
    %v133 = vmul.f32 %v132, 0.0
    %135 = vrot.lane.b32.xlu0 %v132, 64
    %v136 = vpop.permute.xlu0 %135
    %v138 = vmul.f32 %v132, %v136
    %140 = vrot.lane.b32.xlu0 %v138, 32
    %v141 = vpop.permute.xlu0 %140
    %v143 = vadd.f32 %v133, %v141
    %v144 = vtanh.pop %v143
    %146 = vrot.lane.b32.xlu0 %v144, 64
    %v147 = vpop.permute.xlu0 %146
    %v149 = vmul.f32 %v132, %v147
    %151 = vrot.lane.b32.xlu0 %v149, 32
    %v152 = vpop.permute.xlu0 %151
    %v153 = vsel %vm87, %v152, 0
    %155 = vmatpush.msra.mxu0 0.0
    %156 = vmatpush.msra.mxu0 0.0
    %157 = vmatpush.msra.mxu0 0.0
    %158 = vmatpush.msra.mxu0 0.0
    %159 = vmatpush.msra.mxu0 0.0
    %160 = vmatpush.msra.mxu0 0.0
    %161 = vmatpush.msra.mxu0 0.0
    %162 = vmatpush.msra.mxu0 0.0
    %163 = vmatpush.msra.mxu0 0.0
    %164 = vmatpush.msra.mxu0 0.0
    %165 = vmatpush.msra.mxu0 0.0
    %166 = vmatpush.msra.mxu0 0.0
    %167 = vmatpush.msra.mxu0 %v70
    %168 = vmatpush.msra.mxu0 %v69
    %169 = vmatpush.msra.mxu0 %v68
    %170 = vmatpush.msra.mxu0 %v67
    %171 = vmatmul.f32.gmra.mxu0 %v153
    %v172 = vpop.f32.mrf.mxu0
    %v173 = vadd.f32 0.0, %v172
    %174 = vdwg.mxu0
    %v176 = vperm.slane %v71, 0
    %v178 = vadd.f32 %v173, %v176
    %179 = vset.pattern.permute.xlu0 1
    %180 = vperm.xlu0 %179, %v72
    %v181 = vpop.permute.xlu0 %180
    %v183 = vmul.f32 %v181, %v83
    %v184 = vadd.f32 %v183, %v85
    %185 = vmatpush.msra.mxu0 0.0
    %186 = vmatpush.msra.mxu0 0.0
    %187 = vmatpush.msra.mxu0 0.0
    %188 = vmatpush.msra.mxu0 0.0
    %189 = vmatpush.msra.mxu0 0.0
    %190 = vmatpush.msra.mxu0 0.0
    %191 = vmatpush.msra.mxu0 0.0
    %192 = vmatpush.msra.mxu0 0.0
    %193 = vmatpush.msra.mxu0 0.0
    %194 = vmatpush.msra.mxu0 0.0
    %195 = vmatpush.msra.mxu0 0.0
    %196 = vmatpush.msra.mxu0 0.0
    %197 = vmatpush.msra.mxu0 %v66
    %198 = vmatpush.msra.mxu0 %v65
    %199 = vmatpush.msra.mxu0 %v64
    %200 = vmatpush.msra.mxu0 %v63
    %201 = vmatmul.f32.gmra.mxu0 %v153
    %v202 = vpop.f32.mrf.mxu0
    %v203 = vadd.f32 0.0, %v202
    %204 = vdwg.mxu0
    %v205 = vadd.f32 %v184, %v203
    %v206 = vtanh.pop %v205
    %v207 = vxor.u32 %v205, 2147483648
    %v208 = vmul.f32 %v207, 1.442695
    %v209 = vpow.pop %v208
    %v210 = vadd.f32 %v209, 1.0
    %v211 = vrcp.pop %v210
    %v212 = vmul.f32 %v210, %v211
    %v213 = vsub.f32 1.0, %v212
    %v214 = vmul.f32 %v211, %v213
    %v215 = vadd.f32 %v211, %v214
    %vm216 = vweird.f32 %v210
    %vm217 = vweird.f32 %v211
    %vm218 = vmor %vm216, %vm217
    %v219 = vsel %vm218, %v211, %v215
    %v220 = vand.u32 2147483647, %v210
    %vm221 = vcmp.eq.f32.partialorder %v220, 8.507059e+37
    %v222 = vand.u32 %v210, 2147483648
    %v223 = vor.u32 1.1754944e-38, %v222
    %v224 = vsel %vm221, %v223, %v219
    %v225 = vmul.f32 1.0, %v224
    %v226 = vsel %vm77, %v206, %v225
    %v227 = vmul.f32 %v226, %v143
    %229 = vrot.lane.b32.xlu0 %v226, 64
    %v230 = vpop.permute.xlu0 %229
    %v232 = vmul.f32 %v226, %v230
    %234 = vrot.lane.b32.xlu0 %v232, 32
    %v235 = vpop.permute.xlu0 %234
    %v237 = vadd.f32 %v227, %v235
    %v238 = vtanh.pop %v237
    %240 = vrot.lane.b32.xlu0 %v238, 64
    %v241 = vpop.permute.xlu0 %240
    %v243 = vmul.f32 %v226, %v241
    %245 = vrot.lane.b32.xlu0 %v243, 32
    %v246 = vpop.permute.xlu0 %245
    %v247 = vsel %vm87, %v246, 0
    %249 = vmatpush.msra.mxu0 0.0
    %250 = vmatpush.msra.mxu0 0.0
    %251 = vmatpush.msra.mxu0 0.0
    %252 = vmatpush.msra.mxu0 0.0
    %253 = vmatpush.msra.mxu0 0.0
    %254 = vmatpush.msra.mxu0 0.0
    %255 = vmatpush.msra.mxu0 0.0
    %256 = vmatpush.msra.mxu0 0.0
    %257 = vmatpush.msra.mxu0 0.0
    %258 = vmatpush.msra.mxu0 0.0
    %259 = vmatpush.msra.mxu0 0.0
    %260 = vmatpush.msra.mxu0 0.0
    %261 = vmatpush.msra.mxu0 %v70
    %262 = vmatpush.msra.mxu0 %v69
    %263 = vmatpush.msra.mxu0 %v68
    %264 = vmatpush.msra.mxu0 %v67
    %265 = vmatmul.f32.gmra.mxu0 %v247
    %v266 = vpop.f32.mrf.mxu0
    %v267 = vadd.f32 0.0, %v266
    %268 = vdwg.mxu0
    %v269 = vadd.f32 %v267, %v176
    %270 = vset.pattern.permute.xlu0 2
    %271 = vperm.xlu0 %270, %v72
    %v272 = vpop.permute.xlu0 %271
    %v274 = vmul.f32 %v272, %v83
    %v275 = vadd.f32 %v274, %v85
    %276 = vmatpush.msra.mxu0 0.0
    %277 = vmatpush.msra.mxu0 0.0
    %278 = vmatpush.msra.mxu0 0.0
    %279 = vmatpush.msra.mxu0 0.0
    %280 = vmatpush.msra.mxu0 0.0
    %281 = vmatpush.msra.mxu0 0.0
    %282 = vmatpush.msra.mxu0 0.0
    %283 = vmatpush.msra.mxu0 0.0
    %284 = vmatpush.msra.mxu0 0.0
    %285 = vmatpush.msra.mxu0 0.0
    %286 = vmatpush.msra.mxu0 0.0
    %287 = vmatpush.msra.mxu0 0.0
    %288 = vmatpush.msra.mxu0 %v66
    %289 = vmatpush.msra.mxu0 %v65
    %290 = vmatpush.msra.mxu0 %v64
    %291 = vmatpush.msra.mxu0 %v63
    %292 = vmatmul.f32.gmra.mxu0 %v247
    %v293 = vpop.f32.mrf.mxu0
    %v294 = vadd.f32 0.0, %v293
    %295 = vdwg.mxu0
    %v296 = vadd.f32 %v275, %v294
    %v297 = vtanh.pop %v296
    %v298 = vxor.u32 %v296, 2147483648
    %v299 = vmul.f32 %v298, 1.442695
    %v300 = vpow.pop %v299
    %v301 = vadd.f32 %v300, 1.0
    %v302 = vrcp.pop %v301
    %v303 = vmul.f32 %v301, %v302
    %v304 = vsub.f32 1.0, %v303
    %v305 = vmul.f32 %v302, %v304
    %v306 = vadd.f32 %v302, %v305
    %vm307 = vweird.f32 %v301
    %vm308 = vweird.f32 %v302
    %vm309 = vmor %vm307, %vm308
    %v310 = vsel %vm309, %v302, %v306
    %v311 = vand.u32 2147483647, %v301
    %vm312 = vcmp.eq.f32.partialorder %v311, 8.507059e+37
    %v313 = vand.u32 %v301, 2147483648
    %v314 = vor.u32 1.1754944e-38, %v313
    %v315 = vsel %vm312, %v314, %v310
    %v316 = vmul.f32 1.0, %v315
    %v317 = vsel %vm77, %v297, %v316
    %v318 = vmul.f32 %v317, %v237
    %320 = vrot.lane.b32.xlu0 %v317, 64
    %v321 = vpop.permute.xlu0 %320
    %v323 = vmul.f32 %v317, %v321
    %325 = vrot.lane.b32.xlu0 %v323, 32
    %v326 = vpop.permute.xlu0 %325
    %v328 = vadd.f32 %v318, %v326
    %v329 = vtanh.pop %v328
    %331 = vrot.lane.b32.xlu0 %v329, 64
    %v332 = vpop.permute.xlu0 %331
    %v334 = vmul.f32 %v317, %v332
    %336 = vrot.lane.b32.xlu0 %v334, 32
    %v337 = vpop.permute.xlu0 %336
    %v338 = vsel %vm87, %v337, 0
    %340 = vmatpush.msra.mxu0 0.0
    %341 = vmatpush.msra.mxu0 0.0
    %342 = vmatpush.msra.mxu0 0.0
    %343 = vmatpush.msra.mxu0 0.0
    %344 = vmatpush.msra.mxu0 0.0
    %345 = vmatpush.msra.mxu0 0.0
    %346 = vmatpush.msra.mxu0 0.0
    %347 = vmatpush.msra.mxu0 0.0
    %348 = vmatpush.msra.mxu0 0.0
    %349 = vmatpush.msra.mxu0 0.0
    %350 = vmatpush.msra.mxu0 0.0
    %351 = vmatpush.msra.mxu0 0.0
    %352 = vmatpush.msra.mxu0 %v70
    %353 = vmatpush.msra.mxu0 %v69
    %354 = vmatpush.msra.mxu0 %v68
    %355 = vmatpush.msra.mxu0 %v67
    %356 = vmatmul.f32.gmra.mxu0 %v338
    %v357 = vpop.f32.mrf.mxu0
    %v358 = vadd.f32 0.0, %v357
    %359 = vdwg.mxu0
    %v360 = vadd.f32 %v358, %v176
    %361 = vset.pattern.permute.xlu0 3
    %362 = vperm.xlu0 %361, %v72
    %v363 = vpop.permute.xlu0 %362
    %v365 = vmul.f32 %v363, %v83
    %v366 = vadd.f32 %v365, %v85
    %367 = vmatpush.msra.mxu0 0.0
    %368 = vmatpush.msra.mxu0 0.0
    %369 = vmatpush.msra.mxu0 0.0
    %370 = vmatpush.msra.mxu0 0.0
    %371 = vmatpush.msra.mxu0 0.0
    %372 = vmatpush.msra.mxu0 0.0
    %373 = vmatpush.msra.mxu0 0.0
    %374 = vmatpush.msra.mxu0 0.0
    %375 = vmatpush.msra.mxu0 0.0
    %376 = vmatpush.msra.mxu0 0.0
    %377 = vmatpush.msra.mxu0 0.0
    %378 = vmatpush.msra.mxu0 0.0
    %379 = vmatpush.msra.mxu0 %v66
    %380 = vmatpush.msra.mxu0 %v65
    %381 = vmatpush.msra.mxu0 %v64
    %382 = vmatpush.msra.mxu0 %v63
    %383 = vmatmul.f32.gmra.mxu0 %v338
    %v384 = vpop.f32.mrf.mxu0
    %v385 = vadd.f32 0.0, %v384
    %386 = vdwg.mxu0
    %v387 = vadd.f32 %v366, %v385
    %v388 = vtanh.pop %v387
    %v389 = vxor.u32 %v387, 2147483648
    %v390 = vmul.f32 %v389, 1.442695
    %v391 = vpow.pop %v390
    %v392 = vadd.f32 %v391, 1.0
    %v393 = vrcp.pop %v392
    %v394 = vmul.f32 %v392, %v393
    %v395 = vsub.f32 1.0, %v394
    %v396 = vmul.f32 %v393, %v395
    %v397 = vadd.f32 %v393, %v396
    %vm398 = vweird.f32 %v392
    %vm399 = vweird.f32 %v393
    %vm400 = vmor %vm398, %vm399
    %v401 = vsel %vm400, %v393, %v397
    %v402 = vand.u32 2147483647, %v392
    %vm403 = vcmp.eq.f32.partialorder %v402, 8.507059e+37
    %v404 = vand.u32 %v392, 2147483648
    %v405 = vor.u32 1.1754944e-38, %v404
    %v406 = vsel %vm403, %v405, %v401
    %v407 = vmul.f32 1.0, %v406
    %v408 = vsel %vm77, %v388, %v407
    %v409 = vmul.f32 %v408, %v328
    %411 = vrot.lane.b32.xlu0 %v408, 64
    %v412 = vpop.permute.xlu0 %411
    %v414 = vmul.f32 %v408, %v412
    %416 = vrot.lane.b32.xlu0 %v414, 32
    %v417 = vpop.permute.xlu0 %416
    %v419 = vadd.f32 %v409, %v417
    %v420 = vtanh.pop %v419
    %422 = vrot.lane.b32.xlu0 %v420, 64
    %v423 = vpop.permute.xlu0 %422
    %v425 = vmul.f32 %v408, %v423
    %427 = vrot.lane.b32.xlu0 %v425, 32
    %v428 = vpop.permute.xlu0 %427
    %v429 = vsel %vm87, %v428, 0
    %431 = vmatpush.msra.mxu0 0.0
    %432 = vmatpush.msra.mxu0 0.0
    %433 = vmatpush.msra.mxu0 0.0
    %434 = vmatpush.msra.mxu0 0.0
    %435 = vmatpush.msra.mxu0 0.0
    %436 = vmatpush.msra.mxu0 0.0
    %437 = vmatpush.msra.mxu0 0.0
    %438 = vmatpush.msra.mxu0 0.0
    %439 = vmatpush.msra.mxu0 0.0
    %440 = vmatpush.msra.mxu0 0.0
    %441 = vmatpush.msra.mxu0 0.0
    %442 = vmatpush.msra.mxu0 0.0
    %443 = vmatpush.msra.mxu0 %v70
    %444 = vmatpush.msra.mxu0 %v69
    %445 = vmatpush.msra.mxu0 %v68
    %446 = vmatpush.msra.mxu0 %v67
    %447 = vmatmul.f32.gmra.mxu0 %v429
    %v448 = vpop.f32.mrf.mxu0
    %v449 = vadd.f32 0.0, %v448
    %450 = vdwg.mxu0
    %v451 = vadd.f32 %v449, %v176
    %452 = vset.pattern.permute.xlu0 4
    %453 = vperm.xlu0 %452, %v72
    %v454 = vpop.permute.xlu0 %453
    %v456 = vmul.f32 %v454, %v83
    %v457 = vadd.f32 %v456, %v85
    %458 = vmatpush.msra.mxu0 0.0
    %459 = vmatpush.msra.mxu0 0.0
    %460 = vmatpush.msra.mxu0 0.0
    %461 = vmatpush.msra.mxu0 0.0
    %462 = vmatpush.msra.mxu0 0.0
    %463 = vmatpush.msra.mxu0 0.0
    %464 = vmatpush.msra.mxu0 0.0
    %465 = vmatpush.msra.mxu0 0.0
    %466 = vmatpush.msra.mxu0 0.0
    %467 = vmatpush.msra.mxu0 0.0
    %468 = vmatpush.msra.mxu0 0.0
    %469 = vmatpush.msra.mxu0 0.0
    %470 = vmatpush.msra.mxu0 %v66
    %471 = vmatpush.msra.mxu0 %v65
    %472 = vmatpush.msra.mxu0 %v64
    %473 = vmatpush.msra.mxu0 %v63
    %474 = vmatmul.f32.gmra.mxu0 %v429
    %v475 = vpop.f32.mrf.mxu0
    %v476 = vadd.f32 0.0, %v475
    %477 = vdwg.mxu0
    %v478 = vadd.f32 %v457, %v476
    %v479 = vtanh.pop %v478
    %v480 = vxor.u32 %v478, 2147483648
    %v481 = vmul.f32 %v480, 1.442695
    %v482 = vpow.pop %v481
    %v483 = vadd.f32 %v482, 1.0
    %v484 = vrcp.pop %v483
    %v485 = vmul.f32 %v483, %v484
    %v486 = vsub.f32 1.0, %v485
    %v487 = vmul.f32 %v484, %v486
    %v488 = vadd.f32 %v484, %v487
    %vm489 = vweird.f32 %v483
    %vm490 = vweird.f32 %v484
    %vm491 = vmor %vm489, %vm490
    %v492 = vsel %vm491, %v484, %v488
    %v493 = vand.u32 2147483647, %v483
    %vm494 = vcmp.eq.f32.partialorder %v493, 8.507059e+37
    %v495 = vand.u32 %v483, 2147483648
    %v496 = vor.u32 1.1754944e-38, %v495
    %v497 = vsel %vm494, %v496, %v492
    %v498 = vmul.f32 1.0, %v497
    %v499 = vsel %vm77, %v479, %v498
    %v500 = vmul.f32 %v499, %v419
    %502 = vrot.lane.b32.xlu0 %v499, 64
    %v503 = vpop.permute.xlu0 %502
    %v505 = vmul.f32 %v499, %v503
    %507 = vrot.lane.b32.xlu0 %v505, 32
    %v508 = vpop.permute.xlu0 %507
    %v510 = vadd.f32 %v500, %v508
    %v511 = vtanh.pop %v510
    %513 = vrot.lane.b32.xlu0 %v511, 64
    %v514 = vpop.permute.xlu0 %513
    %v516 = vmul.f32 %v499, %v514
    %518 = vrot.lane.b32.xlu0 %v516, 32
    %v519 = vpop.permute.xlu0 %518
    %v520 = vsel %vm87, %v519, 0
    %522 = vmatpush.msra.mxu0 0.0
    %523 = vmatpush.msra.mxu0 0.0
    %524 = vmatpush.msra.mxu0 0.0
    %525 = vmatpush.msra.mxu0 0.0
    %526 = vmatpush.msra.mxu0 0.0
    %527 = vmatpush.msra.mxu0 0.0
    %528 = vmatpush.msra.mxu0 0.0
    %529 = vmatpush.msra.mxu0 0.0
    %530 = vmatpush.msra.mxu0 0.0
    %531 = vmatpush.msra.mxu0 0.0
    %532 = vmatpush.msra.mxu0 0.0
    %533 = vmatpush.msra.mxu0 0.0
    %534 = vmatpush.msra.mxu0 %v70
    %535 = vmatpush.msra.mxu0 %v69
    %536 = vmatpush.msra.mxu0 %v68
    %537 = vmatpush.msra.mxu0 %v67
    %538 = vmatmul.f32.gmra.mxu0 %v520
    %v539 = vpop.f32.mrf.mxu0
    %v540 = vadd.f32 0.0, %v539
    %541 = vdwg.mxu0
    %v542 = vadd.f32 %v540, %v176
    %543 = vset.pattern.permute.xlu0 5
    %544 = vperm.xlu0 %543, %v72
    %v545 = vpop.permute.xlu0 %544
    %v547 = vmul.f32 %v545, %v83
    %v548 = vadd.f32 %v547, %v85
    %549 = vmatpush.msra.mxu0 0.0
    %550 = vmatpush.msra.mxu0 0.0
    %551 = vmatpush.msra.mxu0 0.0
    %552 = vmatpush.msra.mxu0 0.0
    %553 = vmatpush.msra.mxu0 0.0
    %554 = vmatpush.msra.mxu0 0.0
    %555 = vmatpush.msra.mxu0 0.0
    %556 = vmatpush.msra.mxu0 0.0
    %557 = vmatpush.msra.mxu0 0.0
    %558 = vmatpush.msra.mxu0 0.0
    %559 = vmatpush.msra.mxu0 0.0
    %560 = vmatpush.msra.mxu0 0.0
    %561 = vmatpush.msra.mxu0 %v66
    %562 = vmatpush.msra.mxu0 %v65
    %563 = vmatpush.msra.mxu0 %v64
    %564 = vmatpush.msra.mxu0 %v63
    %565 = vmatmul.f32.gmra.mxu0 %v520
    %v566 = vpop.f32.mrf.mxu0
    %v567 = vadd.f32 0.0, %v566
    %568 = vdwg.mxu0
    %v569 = vadd.f32 %v548, %v567
    %v570 = vtanh.pop %v569
    %v571 = vxor.u32 %v569, 2147483648
    %v572 = vmul.f32 %v571, 1.442695
    %v573 = vpow.pop %v572
    %v574 = vadd.f32 %v573, 1.0
    %v575 = vrcp.pop %v574
    %v576 = vmul.f32 %v574, %v575
    %v577 = vsub.f32 1.0, %v576
    %v578 = vmul.f32 %v575, %v577
    %v579 = vadd.f32 %v575, %v578
    %vm580 = vweird.f32 %v574
    %vm581 = vweird.f32 %v575
    %vm582 = vmor %vm580, %vm581
    %v583 = vsel %vm582, %v575, %v579
    %v584 = vand.u32 2147483647, %v574
    %vm585 = vcmp.eq.f32.partialorder %v584, 8.507059e+37
    %v586 = vand.u32 %v574, 2147483648
    %v587 = vor.u32 1.1754944e-38, %v586
    %v588 = vsel %vm585, %v587, %v583
    %v589 = vmul.f32 1.0, %v588
    %v590 = vsel %vm77, %v570, %v589
    %v591 = vmul.f32 %v590, %v510
    %593 = vrot.lane.b32.xlu0 %v590, 64
    %v594 = vpop.permute.xlu0 %593
    %v596 = vmul.f32 %v590, %v594
    %598 = vrot.lane.b32.xlu0 %v596, 32
    %v599 = vpop.permute.xlu0 %598
    %v601 = vadd.f32 %v591, %v599
    %v602 = vtanh.pop %v601
    %604 = vrot.lane.b32.xlu0 %v602, 64
    %v605 = vpop.permute.xlu0 %604
    %v607 = vmul.f32 %v590, %v605
    %609 = vrot.lane.b32.xlu0 %v607, 32
    %v610 = vpop.permute.xlu0 %609
    %v611 = vsel %vm87, %v610, 0
    %613 = vmatpush.msra.mxu0 0.0
    %614 = vmatpush.msra.mxu0 0.0
    %615 = vmatpush.msra.mxu0 0.0
    %616 = vmatpush.msra.mxu0 0.0
    %617 = vmatpush.msra.mxu0 0.0
    %618 = vmatpush.msra.mxu0 0.0
    %619 = vmatpush.msra.mxu0 0.0
    %620 = vmatpush.msra.mxu0 0.0
    %621 = vmatpush.msra.mxu0 0.0
    %622 = vmatpush.msra.mxu0 0.0
    %623 = vmatpush.msra.mxu0 0.0
    %624 = vmatpush.msra.mxu0 0.0
    %625 = vmatpush.msra.mxu0 %v70
    %626 = vmatpush.msra.mxu0 %v69
    %627 = vmatpush.msra.mxu0 %v68
    %628 = vmatpush.msra.mxu0 %v67
    %629 = vmatmul.f32.gmra.mxu0 %v611
    %v630 = vpop.f32.mrf.mxu0
    %v631 = vadd.f32 0.0, %v630
    %632 = vdwg.mxu0
    %v633 = vadd.f32 %v631, %v176
    %634 = vset.pattern.permute.xlu0 6
    %635 = vperm.xlu0 %634, %v72
    %v636 = vpop.permute.xlu0 %635
    %v638 = vmul.f32 %v636, %v83
    %v639 = vadd.f32 %v638, %v85
    %640 = vmatpush.msra.mxu0 0.0
    %641 = vmatpush.msra.mxu0 0.0
    %642 = vmatpush.msra.mxu0 0.0
    %643 = vmatpush.msra.mxu0 0.0
    %644 = vmatpush.msra.mxu0 0.0
    %645 = vmatpush.msra.mxu0 0.0
    %646 = vmatpush.msra.mxu0 0.0
    %647 = vmatpush.msra.mxu0 0.0
    %648 = vmatpush.msra.mxu0 0.0
    %649 = vmatpush.msra.mxu0 0.0
    %650 = vmatpush.msra.mxu0 0.0
    %651 = vmatpush.msra.mxu0 0.0
    %652 = vmatpush.msra.mxu0 %v66
    %653 = vmatpush.msra.mxu0 %v65
    %654 = vmatpush.msra.mxu0 %v64
    %655 = vmatpush.msra.mxu0 %v63
    %656 = vmatmul.f32.gmra.mxu0 %v611
    %v657 = vpop.f32.mrf.mxu0
    %v658 = vadd.f32 0.0, %v657
    %659 = vdwg.mxu0
    %v660 = vadd.f32 %v639, %v658
    %v661 = vtanh.pop %v660
    %v662 = vxor.u32 %v660, 2147483648
    %v663 = vmul.f32 %v662, 1.442695
    %v664 = vpow.pop %v663
    %v665 = vadd.f32 %v664, 1.0
    %v666 = vrcp.pop %v665
    %v667 = vmul.f32 %v665, %v666
    %v668 = vsub.f32 1.0, %v667
    %v669 = vmul.f32 %v666, %v668
    %v670 = vadd.f32 %v666, %v669
    %vm671 = vweird.f32 %v665
    %vm672 = vweird.f32 %v666
    %vm673 = vmor %vm671, %vm672
    %v674 = vsel %vm673, %v666, %v670
    %v675 = vand.u32 2147483647, %v665
    %vm676 = vcmp.eq.f32.partialorder %v675, 8.507059e+37
    %v677 = vand.u32 %v665, 2147483648
    %v678 = vor.u32 1.1754944e-38, %v677
    %v679 = vsel %vm676, %v678, %v674
    %v680 = vmul.f32 1.0, %v679
    %v681 = vsel %vm77, %v661, %v680
    %v682 = vmul.f32 %v681, %v601
    %684 = vrot.lane.b32.xlu0 %v681, 64
    %v685 = vpop.permute.xlu0 %684
    %v687 = vmul.f32 %v681, %v685
    %689 = vrot.lane.b32.xlu0 %v687, 32
    %v690 = vpop.permute.xlu0 %689
    %v692 = vadd.f32 %v682, %v690
    %v693 = vtanh.pop %v692
    %695 = vrot.lane.b32.xlu0 %v693, 64
    %v696 = vpop.permute.xlu0 %695
    %v698 = vmul.f32 %v681, %v696
    %700 = vrot.lane.b32.xlu0 %v698, 32
    %v701 = vpop.permute.xlu0 %700
    %v702 = vsel %vm87, %v701, 0
    %704 = vmatpush.msra.mxu0 0.0
    %705 = vmatpush.msra.mxu0 0.0
    %706 = vmatpush.msra.mxu0 0.0
    %707 = vmatpush.msra.mxu0 0.0
    %708 = vmatpush.msra.mxu0 0.0
    %709 = vmatpush.msra.mxu0 0.0
    %710 = vmatpush.msra.mxu0 0.0
    %711 = vmatpush.msra.mxu0 0.0
    %712 = vmatpush.msra.mxu0 0.0
    %713 = vmatpush.msra.mxu0 0.0
    %714 = vmatpush.msra.mxu0 0.0
    %715 = vmatpush.msra.mxu0 0.0
    %716 = vmatpush.msra.mxu0 %v70
    %717 = vmatpush.msra.mxu0 %v69
    %718 = vmatpush.msra.mxu0 %v68
    %719 = vmatpush.msra.mxu0 %v67
    %720 = vmatmul.f32.gmra.mxu0 %v702
    %v721 = vpop.f32.mrf.mxu0
    %v722 = vadd.f32 0.0, %v721
    %723 = vdwg.mxu0
    %v724 = vadd.f32 %v722, %v176
    %725 = vset.pattern.permute.xlu0 7
    %726 = vperm.xlu0 %725, %v72
    %v727 = vpop.permute.xlu0 %726
    %v729 = vmul.f32 %v727, %v83
    %v730 = vadd.f32 %v729, %v85
    %731 = vmatpush.msra.mxu0 0.0
    %732 = vmatpush.msra.mxu0 0.0
    %733 = vmatpush.msra.mxu0 0.0
    %734 = vmatpush.msra.mxu0 0.0
    %735 = vmatpush.msra.mxu0 0.0
    %736 = vmatpush.msra.mxu0 0.0
    %737 = vmatpush.msra.mxu0 0.0
    %738 = vmatpush.msra.mxu0 0.0
    %739 = vmatpush.msra.mxu0 0.0
    %740 = vmatpush.msra.mxu0 0.0
    %741 = vmatpush.msra.mxu0 0.0
    %742 = vmatpush.msra.mxu0 0.0
    %743 = vmatpush.msra.mxu0 %v66
    %744 = vmatpush.msra.mxu0 %v65
    %745 = vmatpush.msra.mxu0 %v64
    %746 = vmatpush.msra.mxu0 %v63
    %747 = vmatmul.f32.gmra.mxu0 %v702
    %v748 = vpop.f32.mrf.mxu0
    %v749 = vadd.f32 0.0, %v748
    %750 = vdwg.mxu0
    %v751 = vadd.f32 %v730, %v749
    %v752 = vtanh.pop %v751
    %v753 = vxor.u32 %v751, 2147483648
    %v754 = vmul.f32 %v753, 1.442695
    %v755 = vpow.pop %v754
    %v756 = vadd.f32 %v755, 1.0
    %v757 = vrcp.pop %v756
    %v758 = vmul.f32 %v756, %v757
    %v759 = vsub.f32 1.0, %v758
    %v760 = vmul.f32 %v757, %v759
    %v761 = vadd.f32 %v757, %v760
    %vm762 = vweird.f32 %v756
    %vm763 = vweird.f32 %v757
    %vm764 = vmor %vm762, %vm763
    %v765 = vsel %vm764, %v757, %v761
    %v766 = vand.u32 2147483647, %v756
    %vm767 = vcmp.eq.f32.partialorder %v766, 8.507059e+37
    %v768 = vand.u32 %v756, 2147483648
    %v769 = vor.u32 1.1754944e-38, %v768
    %v770 = vsel %vm767, %v769, %v765
    %v771 = vmul.f32 1.0, %v770
    %v772 = vsel %vm77, %v752, %v771
    %v773 = vmul.f32 %v772, %v692
    %775 = vrot.lane.b32.xlu0 %v772, 64
    %v776 = vpop.permute.xlu0 %775
    %v778 = vmul.f32 %v772, %v776
    %780 = vrot.lane.b32.xlu0 %v778, 32
    %v781 = vpop.permute.xlu0 %780
    %v783 = vadd.f32 %v773, %v781
    %v784 = vtanh.pop %v783
    %786 = vrot.lane.b32.xlu0 %v784, 64
    %v787 = vpop.permute.xlu0 %786
    %v789 = vmul.f32 %v772, %v787
    %791 = vrot.lane.b32.xlu0 %v789, 32
    %v792 = vpop.permute.xlu0 %791
    %v793 = vsel %vm87, %v792, 0
    %795 = vmatpush.msra.mxu0 0.0
    %796 = vmatpush.msra.mxu0 0.0
    %797 = vmatpush.msra.mxu0 0.0
    %798 = vmatpush.msra.mxu0 0.0
    %799 = vmatpush.msra.mxu0 0.0
    %800 = vmatpush.msra.mxu0 0.0
    %801 = vmatpush.msra.mxu0 0.0
    %802 = vmatpush.msra.mxu0 0.0
    %803 = vmatpush.msra.mxu0 0.0
    %804 = vmatpush.msra.mxu0 0.0
    %805 = vmatpush.msra.mxu0 0.0
    %806 = vmatpush.msra.mxu0 0.0
    %807 = vmatpush.msra.mxu0 %v70
    %808 = vmatpush.msra.mxu0 %v69
    %809 = vmatpush.msra.mxu0 %v68
    %810 = vmatpush.msra.mxu0 %v67
    %811 = vmatmul.f32.gmra.mxu0 %v793
    %v812 = vpop.f32.mrf.mxu0
    %v813 = vadd.f32 0.0, %v812
    %814 = vdwg.mxu0
    %v815 = vadd.f32 %v813, %v176
    %817 = vrot.lane.b32.xlu0 %v173, 96
    %v818 = vpop.permute.xlu0 %817
    %821 = vrot.lane.b32.xlu0 %v267, 97
    %v822 = vpop.permute.xlu0 %821
    %825 = vrot.lane.b32.xlu0 %v358, 98
    %v826 = vpop.permute.xlu0 %825
    %829 = vrot.lane.b32.xlu0 %v449, 99
    %v830 = vpop.permute.xlu0 %829
    %833 = vrot.lane.b32.xlu0 %v540, 100
    %v834 = vpop.permute.xlu0 %833
    %837 = vrot.lane.b32.xlu0 %v631, 101
    %v838 = vpop.permute.xlu0 %837
    %841 = vrot.lane.b32.xlu0 %v722, 102
    %v842 = vpop.permute.xlu0 %841
    %845 = vrot.lane.b32.xlu0 %v813, 103
    %v846 = vpop.permute.xlu0 %845
    %vm848 = vcmask 7168
    %v849 = vsel %vm848, %v818, %v822
    %vm850 = vcmask 15360
    %v851 = vsel %vm850, %v849, %v826
    %vm852 = vcmask 23552
    %v853 = vsel %vm852, %v851, %v830
    %vm854 = vcmask 31744
    %v855 = vsel %vm854, %v853, %v834
    %vm856 = vcmask 39936
    %v857 = vsel %vm856, %v855, %v838
    %vm858 = vcmask 48128
    %v859 = vsel %vm858, %v857, %v842
    %vm860 = vcmask 56320
    %v861 = vsel %vm860, %v859, %v846
    %vm862 = vcmask 58368
    %v863 = vsel %vm862, %v861, -inf
    %864 = vmax.xlane.f32.xlu0 %v863
    %v865 = vpop.xlane.xlu0 %864
    %v866 = vsub.f32 %v861, %v865
    %v867 = vmul.f32 %v866, 1.442695
    %v868 = vpow.pop %v867
    %v869 = vsel %vm862, %v868, 0.0
    %870 = vadd.xlane.f32.xlu0 %v869
    %v871 = vpop.xlane.xlu0 %870
    %v872 = vrcp.pop %v871
    %v873 = vmul.f32 %v868, %v872
    %875 = vset.pattern.permute.xlu0 0
    %876 = vperm.xlu0 %875, %v873
    %v877 = vpop.permute.xlu0 %876
    %v879 = vmul.f32 %v877, %v178
    %880 = vset.pattern.permute.xlu0 1
    %881 = vperm.xlu0 %880, %v873
    %v882 = vpop.permute.xlu0 %881
    %v884 = vmul.f32 %v882, %v269
    %885 = vset.pattern.permute.xlu0 2
    %886 = vperm.xlu0 %885, %v873
    %v887 = vpop.permute.xlu0 %886
    %v889 = vmul.f32 %v887, %v360
    %890 = vset.pattern.permute.xlu0 3
    %891 = vperm.xlu0 %890, %v873
    %v892 = vpop.permute.xlu0 %891
    %v894 = vmul.f32 %v892, %v451
    %895 = vset.pattern.permute.xlu0 4
    %896 = vperm.xlu0 %895, %v873
    %v897 = vpop.permute.xlu0 %896
    %v899 = vmul.f32 %v897, %v542
    %900 = vset.pattern.permute.xlu0 5
    %901 = vperm.xlu0 %900, %v873
    %v902 = vpop.permute.xlu0 %901
    %v904 = vmul.f32 %v902, %v633
    %905 = vset.pattern.permute.xlu0 6
    %906 = vperm.xlu0 %905, %v873
    %v907 = vpop.permute.xlu0 %906
    %v909 = vmul.f32 %v907, %v724
    %910 = vset.pattern.permute.xlu0 7
    %911 = vperm.xlu0 %910, %v873
    %v912 = vpop.permute.xlu0 %911
    %v914 = vmul.f32 %v912, %v815
    %v915 = vadd.f32 %v879, %v884
    %v916 = vadd.f32 %v889, %v894
    %v917 = vadd.f32 %v899, %v904
    %v918 = vadd.f32 %v909, %v914
    %v919 = vadd.f32 %v915, %v916
    %v920 = vadd.f32 %v917, %v918
    %v921 = vadd.f32 %v919, %v920
    %926 = vrot.lane.b32.xlu0 %v67, 95
    %v927 = vpop.permute.xlu0 %926
    %928 = vrot.lane.b32.xlu0 %v68, 95
    %v929 = vpop.permute.xlu0 %928
    %930 = vrot.lane.b32.xlu0 %v69, 95
    %v931 = vpop.permute.xlu0 %930
    %932 = vrot.lane.b32.xlu0 %v70, 95
    %v933 = vpop.permute.xlu0 %932
    %938 = vrot.lane.b32.xlu0 %v176, 96
    %v939 = vpop.permute.xlu0 %938
    %v942 = vsel %vm87, %v921, 0
    %944 = vmatpush.msra.mxu0 0.0
    %945 = vmatpush.msra.mxu0 0.0
    %946 = vmatpush.msra.mxu0 0.0
    %947 = vmatpush.msra.mxu0 0.0
    %948 = vmatpush.msra.mxu0 0.0
    %949 = vmatpush.msra.mxu0 0.0
    %950 = vmatpush.msra.mxu0 0.0
    %951 = vmatpush.msra.mxu0 0.0
    %952 = vmatpush.msra.mxu0 0.0
    %953 = vmatpush.msra.mxu0 0.0
    %954 = vmatpush.msra.mxu0 0.0
    %955 = vmatpush.msra.mxu0 0.0
    %956 = vmatpush.msra.mxu0 %v933
    %957 = vmatpush.msra.mxu0 %v931
    %958 = vmatpush.msra.mxu0 %v929
    %959 = vmatpush.msra.mxu0 %v927
    %960 = vmatmul.f32.gmra.mxu0 %v942
    %v961 = vpop.f32.mrf.mxu0
    %v962 = vadd.f32 %v939, %v961
    %963 = vdwg.mxu0
    %964 = vst.msk [vmem:[#allocation8] sm:$0x3] %vm862, %v962
    // Predicated region
    $region30: #{tpu_custom_call.1} parent=1 // pred_check
      _
    $region31: #{tpu_custom_call.1} parent=1 // pred_check_branch
      %966 = sbr.rel (0) target = $region33
    $region32: #{tpu_custom_call.1} parent=1 // pred_region
      %968 = vsyncadd [#allocation4], 0
      %s970 = sshll.u32 [#allocation8], 4
      %s971 = int_to_ptr.vmem [resolvable:$true] %s970
      %s972 = sshll.u32 %s4, 4
      %s973 = int_to_ptr.hbm [resolvable:$true] %s972
      %975 = dma.vmem_to_hbm [thread:$0]  %s971, 32, %s973, [#allocation4]
    $region33: #{tpu_custom_call.1} parent=1 // pred_fallthru
      _
    // Predicated region
    $region34: #{tpu_custom_call.1} parent=1 // pred_check
      _
    $region35: #{tpu_custom_call.1} parent=1 // pred_check_branch
      %977 = sbr.rel (0) target = $region37
    $region36: #{tpu_custom_call.1} parent=1 // pred_region
      %979 = dma.done [#allocation4], 32
    $region37: #{tpu_custom_call.1} parent=1 // pred_fallthru
      _
    %980 = vsyncpa [#allocation3], 1
    %981 = vsyncpa [#allocation6], 1
    %982 = vsyncpa [#allocation4], 1

</llo_original>
